<compile_context>
chip_gen: v5e
topology: v5e:2x2
jax: 0.10.0
libtpu: 0.0.40
codegen_flags: <defaults>
</compile_context>

<pallas_src>
import jax
import jax.numpy as jnp
from jax.experimental import pallas as pl
from jax.experimental.pallas import tpu as pltpu

LANE = 128   # vreg lane width
SUB = 8      # f32 sublane granularity


def _make_mlp_kernel(hidden):
    def mlp_kernel(params_ref, x_ref, o_ref):
        # params_ref: SMEM (3*hidden + 1,) f32 = [w1[0..H-1], b1[..], w2[..], b2]
        # x_ref:      VMEM (TB, 128) f32, batch packed into lanes/sublanes
        # o_ref:      VMEM (TB, 128) f32, same batch-packed layout
        x = x_ref[...]
        acc = jnp.zeros(x.shape, jnp.float32)
        for j in range(hidden):                      # statically unrolled (hidden=5)
            h = x * params_ref[j] + params_ref[hidden + j]
            s = 0.5 * jnp.tanh(0.5 * h) + 0.5        # sigmoid via EUP tanh, no divide
            acc = acc + s * params_ref[2 * hidden + j]
        o_ref[...] = (acc + params_ref[3 * hidden]).astype(o_ref.dtype)

    return mlp_kernel


def mlp_forward(x, w1, b1, w2, b2, *, block_batch=8192):
    batch, in_features = x.shape
    hidden, out_features = w2.shape
    assert w1.shape == (in_features, hidden)
    assert b1.reshape(-1).shape == (hidden,)
    # This kernel implements the module defaults: the K=1 first layer is a
    # scalar broadcast-multiply and the N=1 head is a scalar-weighted sum.
    assert in_features == 1, "kernel path requires in_features == 1"
    assert out_features == 1, "kernel path requires out_features == 1"

    f32 = jnp.float32

    # Flat scalar parameter vector for SMEM scalar prefetch.
    params = jnp.concatenate([
        w1.reshape(hidden).astype(f32),
        b1.reshape(hidden).astype(f32),
        w2.reshape(hidden).astype(f32),
        b2.reshape(1).astype(f32),
    ])

    # Pack batch into lanes: one vreg row = 128 batch elements.
    rows_needed = pl.cdiv(batch, LANE)

    # Rows per grid step: large tiles (default 64 rows = 8192 batch elems) to
    # amortize per-step overhead, but split a single-tile case into >=2 steps
    # when there is enough work so both v7x TensorCores get a grid step.
    tb = max(SUB, ((block_batch // LANE) // SUB) * SUB)
    if SUB < rows_needed <= tb:
        tb = max(SUB, (pl.cdiv(rows_needed, 2) // SUB) * SUB)
    tb = min(tb, max(SUB, pl.cdiv(rows_needed, SUB) * SUB))   # don't over-pad tiny batches

    padded_rows = pl.cdiv(rows_needed, tb) * tb
    padded_batch = padded_rows * LANE

    xf = x.reshape(batch).astype(f32)
    if padded_batch != batch:
        xf = jnp.zeros((padded_batch,), f32).at[:batch].set(xf)
    xp = xf.reshape(padded_rows, LANE)

    out_packed = pl.pallas_call(
        _make_mlp_kernel(hidden),
        out_shape=jax.ShapeDtypeStruct((padded_rows, LANE), f32),
        grid_spec=pltpu.PrefetchScalarGridSpec(
            num_scalar_prefetch=1,                     # params -> SMEM
            grid=(padded_rows // tb,),
            in_specs=[pl.BlockSpec((tb, LANE), lambda i, params: (i, 0))],
            out_specs=pl.BlockSpec((tb, LANE), lambda i, params: (i, 0)),
        ),
        compiler_params=pltpu.CompilerParams(
            dimension_semantics=("parallel",),         # batch rows -> both TCs on v7x
        ),
    )(params, xp)

    out = out_packed.reshape(padded_batch)[:batch].reshape(batch, out_features)
    return out.astype(x.dtype)


def init_params(key, in_features=1, hidden_dim=5, out_features=1):
    # Deterministic init mimicking torch.nn.Linear default: U(-1/sqrt(fan_in), +1/sqrt(fan_in)).
    k1, k2, k3, k4 = jax.random.split(key, 4)
    bnd1 = 1.0 / (in_features ** 0.5)
    bnd2 = 1.0 / (hidden_dim ** 0.5)
    w1 = jax.random.uniform(k1, (in_features, hidden_dim), jnp.float32, -bnd1, bnd1)
    b1 = jax.random.uniform(k2, (1, hidden_dim), jnp.float32, -bnd1, bnd1)
    w2 = jax.random.uniform(k3, (hidden_dim, out_features), jnp.float32, -bnd2, bnd2)
    b2 = jax.random.uniform(k4, (1, out_features), jnp.float32, -bnd2, bnd2)
    return w1, b1, w2, b2


def reference_forward(x, w1, b1, w2, b2):
    h = jax.nn.sigmoid(x @ w1 + b1)
    return h @ w2 + b2


if __name__ == "__main__":
    key = jax.random.PRNGKey(0)
    kx, kp = jax.random.split(key)

    batch, in_features, hidden_dim, out_features = 8, 1, 5, 1
    x = jax.random.normal(kx, (batch, in_features), jnp.float32)
    w1, b1, w2, b2 = init_params(kp, in_features, hidden_dim, out_features)

    out = mlp_forward(x, w1, b1, w2, b2)
    out = jax.block_until_ready(out)

    ref = reference_forward(x, w1, b1, w2, b2)
    assert out.shape == (batch, out_features)
    assert jnp.allclose(out, ref, atol=1e-5, rtol=1e-5)

    print("KERNEL_OK")
</pallas_src>

<mosaic_0001>
module attributes {stable_mosaic.version = 11 : i64} {
  func.func @mlp_kernel(%arg0: i32, %arg1: memref<16xf32, #tpu.memory_space<smem>>, %arg2: memref<8x128xf32, #tpu.memory_space<vmem>>, %arg3: memref<8x128xf32, #tpu.memory_space<vmem>>) attributes {dimension_semantics = [#tpu.dimension_semantics<parallel>], iteration_bounds = array<i64: 1>, scalar_prefetch = 1 : i64, scratch_operands = 0 : i64, tpu.core_type = #tpu.core_type<tc>, window_params = [{transform_indices = @transform_0, window_bounds = array<i64: 8, 128>}, {transform_indices = @transform_1, window_bounds = array<i64: 8, 128>}]} {
    %c0 = arith.constant 0 : index
    %c0_0 = arith.constant 0 : index
    %0 = vector.load %arg2[%c0, %c0_0] : memref<8x128xf32, #tpu.memory_space<vmem>>, vector<8x128xf32>
    %cst = arith.constant 0.000000e+00 : f32
    %1 = vector.broadcast %cst : f32 to vector<8x128xf32>
    %c0_1 = arith.constant 0 : index
    %2 = memref.load %arg1[%c0_1] : memref<16xf32, #tpu.memory_space<smem>>
    %3 = vector.broadcast %2 : f32 to vector<8x128xf32>
    %4 = arith.mulf %0, %3 : vector<8x128xf32>
    %c5 = arith.constant 5 : index
    %5 = memref.load %arg1[%c5] : memref<16xf32, #tpu.memory_space<smem>>
    %6 = vector.broadcast %5 : f32 to vector<8x128xf32>
    %7 = arith.addf %4, %6 : vector<8x128xf32>
    %cst_2 = arith.constant 5.000000e-01 : f32
    %8 = vector.broadcast %cst_2 : f32 to vector<8x128xf32>
    %9 = arith.mulf %8, %7 : vector<8x128xf32>
    %10 = math.tanh %9 : vector<8x128xf32>
    %cst_3 = arith.constant 5.000000e-01 : f32
    %11 = vector.broadcast %cst_3 : f32 to vector<8x128xf32>
    %12 = arith.mulf %11, %10 : vector<8x128xf32>
    %cst_4 = arith.constant 5.000000e-01 : f32
    %13 = vector.broadcast %cst_4 : f32 to vector<8x128xf32>
    %14 = arith.addf %12, %13 : vector<8x128xf32>
    %c10 = arith.constant 10 : index
    %15 = memref.load %arg1[%c10] : memref<16xf32, #tpu.memory_space<smem>>
    %16 = vector.broadcast %15 : f32 to vector<8x128xf32>
    %17 = arith.mulf %14, %16 : vector<8x128xf32>
    %18 = arith.addf %1, %17 : vector<8x128xf32>
    %c1 = arith.constant 1 : index
    %19 = memref.load %arg1[%c1] : memref<16xf32, #tpu.memory_space<smem>>
    %20 = vector.broadcast %19 : f32 to vector<8x128xf32>
    %21 = arith.mulf %0, %20 : vector<8x128xf32>
    %c6 = arith.constant 6 : index
    %22 = memref.load %arg1[%c6] : memref<16xf32, #tpu.memory_space<smem>>
    %23 = vector.broadcast %22 : f32 to vector<8x128xf32>
    %24 = arith.addf %21, %23 : vector<8x128xf32>
    %cst_5 = arith.constant 5.000000e-01 : f32
    %25 = vector.broadcast %cst_5 : f32 to vector<8x128xf32>
    %26 = arith.mulf %25, %24 : vector<8x128xf32>
    %27 = math.tanh %26 : vector<8x128xf32>
    %cst_6 = arith.constant 5.000000e-01 : f32
    %28 = vector.broadcast %cst_6 : f32 to vector<8x128xf32>
    %29 = arith.mulf %28, %27 : vector<8x128xf32>
    %cst_7 = arith.constant 5.000000e-01 : f32
    %30 = vector.broadcast %cst_7 : f32 to vector<8x128xf32>
    %31 = arith.addf %29, %30 : vector<8x128xf32>
    %c11 = arith.constant 11 : index
    %32 = memref.load %arg1[%c11] : memref<16xf32, #tpu.memory_space<smem>>
    %33 = vector.broadcast %32 : f32 to vector<8x128xf32>
    %34 = arith.mulf %31, %33 : vector<8x128xf32>
    %35 = arith.addf %18, %34 : vector<8x128xf32>
    %c2 = arith.constant 2 : index
    %36 = memref.load %arg1[%c2] : memref<16xf32, #tpu.memory_space<smem>>
    %37 = vector.broadcast %36 : f32 to vector<8x128xf32>
    %38 = arith.mulf %0, %37 : vector<8x128xf32>
    %c7 = arith.constant 7 : index
    %39 = memref.load %arg1[%c7] : memref<16xf32, #tpu.memory_space<smem>>
    %40 = vector.broadcast %39 : f32 to vector<8x128xf32>
    %41 = arith.addf %38, %40 : vector<8x128xf32>
    %cst_8 = arith.constant 5.000000e-01 : f32
    %42 = vector.broadcast %cst_8 : f32 to vector<8x128xf32>
    %43 = arith.mulf %42, %41 : vector<8x128xf32>
    %44 = math.tanh %43 : vector<8x128xf32>
    %cst_9 = arith.constant 5.000000e-01 : f32
    %45 = vector.broadcast %cst_9 : f32 to vector<8x128xf32>
    %46 = arith.mulf %45, %44 : vector<8x128xf32>
    %cst_10 = arith.constant 5.000000e-01 : f32
    %47 = vector.broadcast %cst_10 : f32 to vector<8x128xf32>
    %48 = arith.addf %46, %47 : vector<8x128xf32>
    %c12 = arith.constant 12 : index
    %49 = memref.load %arg1[%c12] : memref<16xf32, #tpu.memory_space<smem>>
    %50 = vector.broadcast %49 : f32 to vector<8x128xf32>
    %51 = arith.mulf %48, %50 : vector<8x128xf32>
    %52 = arith.addf %35, %51 : vector<8x128xf32>
    %c3 = arith.constant 3 : index
    %53 = memref.load %arg1[%c3] : memref<16xf32, #tpu.memory_space<smem>>
    %54 = vector.broadcast %53 : f32 to vector<8x128xf32>
    %55 = arith.mulf %0, %54 : vector<8x128xf32>
    %c8 = arith.constant 8 : index
    %56 = memref.load %arg1[%c8] : memref<16xf32, #tpu.memory_space<smem>>
    %57 = vector.broadcast %56 : f32 to vector<8x128xf32>
    %58 = arith.addf %55, %57 : vector<8x128xf32>
    %cst_11 = arith.constant 5.000000e-01 : f32
    %59 = vector.broadcast %cst_11 : f32 to vector<8x128xf32>
    %60 = arith.mulf %59, %58 : vector<8x128xf32>
    %61 = math.tanh %60 : vector<8x128xf32>
    %cst_12 = arith.constant 5.000000e-01 : f32
    %62 = vector.broadcast %cst_12 : f32 to vector<8x128xf32>
    %63 = arith.mulf %62, %61 : vector<8x128xf32>
    %cst_13 = arith.constant 5.000000e-01 : f32
    %64 = vector.broadcast %cst_13 : f32 to vector<8x128xf32>
    %65 = arith.addf %63, %64 : vector<8x128xf32>
    %c13 = arith.constant 13 : index
    %66 = memref.load %arg1[%c13] : memref<16xf32, #tpu.memory_space<smem>>
    %67 = vector.broadcast %66 : f32 to vector<8x128xf32>
    %68 = arith.mulf %65, %67 : vector<8x128xf32>
    %69 = arith.addf %52, %68 : vector<8x128xf32>
    %c4 = arith.constant 4 : index
    %70 = memref.load %arg1[%c4] : memref<16xf32, #tpu.memory_space<smem>>
    %71 = vector.broadcast %70 : f32 to vector<8x128xf32>
    %72 = arith.mulf %0, %71 : vector<8x128xf32>
    %c9 = arith.constant 9 : index
    %73 = memref.load %arg1[%c9] : memref<16xf32, #tpu.memory_space<smem>>
    %74 = vector.broadcast %73 : f32 to vector<8x128xf32>
    %75 = arith.addf %72, %74 : vector<8x128xf32>
    %cst_14 = arith.constant 5.000000e-01 : f32
    %76 = vector.broadcast %cst_14 : f32 to vector<8x128xf32>
    %77 = arith.mulf %76, %75 : vector<8x128xf32>
    %78 = math.tanh %77 : vector<8x128xf32>
    %cst_15 = arith.constant 5.000000e-01 : f32
    %79 = vector.broadcast %cst_15 : f32 to vector<8x128xf32>
    %80 = arith.mulf %79, %78 : vector<8x128xf32>
    %cst_16 = arith.constant 5.000000e-01 : f32
    %81 = vector.broadcast %cst_16 : f32 to vector<8x128xf32>
    %82 = arith.addf %80, %81 : vector<8x128xf32>
    %c14 = arith.constant 14 : index
    %83 = memref.load %arg1[%c14] : memref<16xf32, #tpu.memory_space<smem>>
    %84 = vector.broadcast %83 : f32 to vector<8x128xf32>
    %85 = arith.mulf %82, %84 : vector<8x128xf32>
    %86 = arith.addf %69, %85 : vector<8x128xf32>
    %c15 = arith.constant 15 : index
    %87 = memref.load %arg1[%c15] : memref<16xf32, #tpu.memory_space<smem>>
    %88 = vector.broadcast %87 : f32 to vector<8x128xf32>
    %89 = arith.addf %86, %88 : vector<8x128xf32>
    %c0_17 = arith.constant 0 : index
    %c0_18 = arith.constant 0 : index
    %90 = vector.load %arg3[%c0_17, %c0_18] : memref<8x128xf32, #tpu.memory_space<vmem>>, vector<8x128xf32>
    tpu.vector_store %arg3[%c0_17, %c0_18], %89 {strides = array<i32>} : memref<8x128xf32, #tpu.memory_space<vmem>>, vector<8x128xf32>,
    return
  }
  func.func @transform_0(%arg0: i32, %arg1: memref<16xf32, #tpu.memory_space<smem>>) -> (i32, i32) {
    %c0_i32 = arith.constant 0 : i32
    %c0_i32_0 = arith.constant 0 : i32
    return %arg0, %c0_i32 : i32, i32
  }
  func.func @transform_1(%arg0: i32, %arg1: memref<16xf32, #tpu.memory_space<smem>>) -> (i32, i32) {
    %c0_i32 = arith.constant 0 : i32
    %c0_i32_0 = arith.constant 0 : i32
    return %arg0, %c0_i32 : i32, i32
  }
}

</mosaic_0001>

<llo_original>
// kernel: tpu_custom_call.1
$region0: #{tpu_custom_call.1}
  #allocation0 [shape = 'u32[]', space=smem, size = 0x4, offset = 0x4, fixed_abs, tag = 'smem constant byte address 0x4 - core index']
  #allocation1 [shape = 'u32[72,128]{1,0:T(1,128)}', space=vmem, size = 0x9000, scoped, tag = 'internal scratch']
  #allocation2 [shape = 's32[1]{0}', space=sflag, size = 0x4, scoped, tag = 'scoped memory for tpu_custom_call.1']
  #allocation3 [shape = 'u8[512]{0}', space=smem, size = 0x200, scoped, tag = 'prefetched SMEM operand 0']
  %s0 = inlined_call_operand.hbm [shape: f32[16], index: 0, kind: input, shape index: {}]
  %s1 = inlined_call_operand.hbm [shape: f32[8,128], index: 1, kind: input, shape index: {}]
  %s2 = inlined_call_operand.hbm [shape: f32[8,128], index: 2, kind: output, shape index: {}]
  %s3 = sld [smem:[#allocation0]]
  $region18: #{tpu_custom_call.1} parent=0
    _
  %s5 = ssub.s32 1, %s3
  %s6 = scalar_select 0, %s5, %s3
  %s8 = sshll.u32 %s0, 4
  %s9 = int_to_ptr.hbm [resolvable:$true] %s8
  %11 = dma.hbm_to_smem %s9, 16, [#allocation3], [#allocation2]
  %13 = dma.done [#allocation2], 16
  %14 = sfence
  $region1: #{tpu_custom_call.1} parent=0
    #allocation4 [shape = 'u8[4096]{0}', space=vmem, size = 0x1000, scoped, tag = 'input window, operand 1, single buffered']
    #allocation5 [shape = 's32[1]{0}', space=sflag, size = 0x4, scoped, tag = 'scoped memory for tpu_custom_call.1']
    #allocation6 [shape = 's32[1]{0}', space=sflag, size = 0x4, scoped, tag = 'scoped memory for tpu_custom_call.1']
    #allocation7 [shape = 'u8[4096]{0}', space=vmem, size = 0x1000, scoped, tag = 'output window, operand 0, single buffered']
    %15 = vsyncpa [#allocation5], 0
    %16 = vsyncpa [#allocation6], 0
    // Predicated region
    $region2: #{tpu_custom_call.1} parent=1 // pred_check
      _
    $region3: #{tpu_custom_call.1} parent=1 // pred_check_branch
      %18 = sbr.rel (0) target = $region5
    $region4: #{tpu_custom_call.1} parent=1 // pred_region
      %20 = vsyncadd [#allocation5], 0
      %s22 = sshll.u32 %s1, 4
      %s23 = int_to_ptr.hbm [resolvable:$true] %s22
      %s24 = sshll.u32 [#allocation4], 4
      %s25 = int_to_ptr.vmem [resolvable:$true] %s24
      %27 = dma.hbm_to_vmem [thread:$0]  %s23, 128, %s25, [#allocation5]
    $region5: #{tpu_custom_call.1} parent=1 // pred_fallthru
      _
    // Predicated region
    $region6: #{tpu_custom_call.1} parent=1 // pred_check
      _
    $region7: #{tpu_custom_call.1} parent=1 // pred_check_branch
      %29 = sbr.rel (0) target = $region9
    $region8: #{tpu_custom_call.1} parent=1 // pred_region
      %31 = dma.done [#allocation5], 128
    $region9: #{tpu_custom_call.1} parent=1 // pred_fallthru
      _
    %v32 = vld [vmem:[#allocation4] sm:$0xff]
    %s33 = sld [smem:[#allocation3]]
    %v34 = vstv %s33
    %v35 = vmul.f32 %v32, %v34
    %s36 = sld [smem:[#allocation3 + $0x5]]
    %v37 = vstv %s36
    %v38 = vadd.f32 %v35, %v37
    %v39 = vmul.f32 %v38, 0.5
    %v40 = vtanh.pop %v39
    %v41 = vmul.f32 %v40, 0.5
    %v42 = vadd.f32 %v41, 0.5
    %s43 = sld [smem:[#allocation3 + $0xa]]
    %v44 = vstv %s43
    %v45 = vmul.f32 %v42, %v44
    %v46 = vadd.f32 %v45, 0.0
    %s47 = sld [smem:[#allocation3 + $0x1]]
    %v48 = vstv %s47
    %v49 = vmul.f32 %v32, %v48
    %s50 = sld [smem:[#allocation3 + $0x6]]
    %v51 = vstv %s50
    %v52 = vadd.f32 %v49, %v51
    %v53 = vmul.f32 %v52, 0.5
    %v54 = vtanh.pop %v53
    %v55 = vmul.f32 %v54, 0.5
    %v56 = vadd.f32 %v55, 0.5
    %s57 = sld [smem:[#allocation3 + $0xb]]
    %v58 = vstv %s57
    %v59 = vmul.f32 %v56, %v58
    %v60 = vadd.f32 %v46, %v59
    %s61 = sld [smem:[#allocation3 + $0x2]]
    %v62 = vstv %s61
    %v63 = vmul.f32 %v32, %v62
    %s64 = sld [smem:[#allocation3 + $0x7]]
    %v65 = vstv %s64
    %v66 = vadd.f32 %v63, %v65
    %v67 = vmul.f32 %v66, 0.5
    %v68 = vtanh.pop %v67
    %v69 = vmul.f32 %v68, 0.5
    %v70 = vadd.f32 %v69, 0.5
    %s71 = sld [smem:[#allocation3 + $0xc]]
    %v72 = vstv %s71
    %v73 = vmul.f32 %v70, %v72
    %v74 = vadd.f32 %v60, %v73
    %s75 = sld [smem:[#allocation3 + $0x3]]
    %v76 = vstv %s75
    %v77 = vmul.f32 %v32, %v76
    %s78 = sld [smem:[#allocation3 + $0x8]]
    %v79 = vstv %s78
    %v80 = vadd.f32 %v77, %v79
    %v81 = vmul.f32 %v80, 0.5
    %v82 = vtanh.pop %v81
    %v83 = vmul.f32 %v82, 0.5
    %v84 = vadd.f32 %v83, 0.5
    %s85 = sld [smem:[#allocation3 + $0xd]]
    %v86 = vstv %s85
    %v87 = vmul.f32 %v84, %v86
    %v88 = vadd.f32 %v74, %v87
    %s89 = sld [smem:[#allocation3 + $0x4]]
    %v90 = vstv %s89
    %v91 = vmul.f32 %v32, %v90
    %s92 = sld [smem:[#allocation3 + $0x9]]
    %v93 = vstv %s92
    %v94 = vadd.f32 %v91, %v93
    %v95 = vmul.f32 %v94, 0.5
    %v96 = vtanh.pop %v95
    %v97 = vmul.f32 %v96, 0.5
    %v98 = vadd.f32 %v97, 0.5
    %s99 = sld [smem:[#allocation3 + $0xe]]
    %v100 = vstv %s99
    %v101 = vmul.f32 %v98, %v100
    %v102 = vadd.f32 %v88, %v101
    %s103 = sld [smem:[#allocation3 + $0xf]]
    %v104 = vstv %s103
    %v105 = vadd.f32 %v102, %v104
    %106 = vst [vmem:[#allocation7] sm:$0xff] %v105
    // Predicated region
    $region10: #{tpu_custom_call.1} parent=1 // pred_check
      _
    $region11: #{tpu_custom_call.1} parent=1 // pred_check_branch
      %108 = sbr.rel (0) target = $region13
    $region12: #{tpu_custom_call.1} parent=1 // pred_region
      %110 = vsyncadd [#allocation6], 0
      %s112 = sshll.u32 [#allocation7], 4
      %s113 = int_to_ptr.vmem [resolvable:$true] %s112
      %s114 = sshll.u32 %s2, 4
      %s115 = int_to_ptr.hbm [resolvable:$true] %s114
      %117 = dma.vmem_to_hbm [thread:$0]  %s113, 128, %s115, [#allocation6]
    $region13: #{tpu_custom_call.1} parent=1 // pred_fallthru
      _
    // Predicated region
    $region14: #{tpu_custom_call.1} parent=1 // pred_check
      _
    $region15: #{tpu_custom_call.1} parent=1 // pred_check_branch
      %119 = sbr.rel (0) target = $region17
    $region16: #{tpu_custom_call.1} parent=1 // pred_region
      %121 = dma.done [#allocation6], 128
    $region17: #{tpu_custom_call.1} parent=1 // pred_fallthru
      _
    %122 = vsyncpa [#allocation5], 1
    %123 = vsyncpa [#allocation6], 1

</llo_original>
